<compile_context>
chip_gen: v6e
topology: v6e:2x2x1
jax: 0.10.0
libtpu: 0.0.40
codegen_flags: <defaults>
</compile_context>

<pallas_src>
import functools

import jax
import jax.numpy as jnp
from jax.experimental import pallas as pl
from jax.experimental.pallas import tpu as pltpu

_LANE = 128
_SUBLANE = 8


def _round_up(x, m):
    return ((x + m - 1) // m) * m


def _numeric_fused_kernel(o_pad, xh_ref, wrec_ref, wout_ref, bout_ref, out_ref):
    """Single-shot fused RNN step + output Linear.

    xh_ref  : (N_pad, K_pad)        [x | h_prev | 1] (zero padded)
    wrec_ref: (K_pad, H_pad)        [[W_ih^T], [W_hh^T], [b_ih + b_hh]] (zero padded)
    wout_ref: (H_pad, O_pad)        W_lin^T (zero padded)
    bout_ref: (1, O_pad)            b_lin (zero padded)
    out_ref : (N_pad, O_pad+H_pad)  [ y | h_new ] packed lane-dense output slab
    """
    # h_t = tanh(x W_ih^T + h_{t-1} W_hh^T + b_ih + b_hh)  -- one MXU pass
    h = jnp.tanh(
        jnp.dot(xh_ref[...], wrec_ref[...], preferred_element_type=jnp.float32)
    )
    # y = h_t W_lin^T + b_lin
    y = jnp.dot(h, wout_ref[...], preferred_element_type=jnp.float32) + bout_ref[...]

    # Packed, 128-lane-aligned static-slice stores (unmasked vst).
    out_ref[:, :o_pad] = y.astype(out_ref.dtype)
    out_ref[:, o_pad:] = h.astype(out_ref.dtype)


def rnn_numeric_pallas(x, h0, w_ih, w_hh, b_ih, b_hh, w_lin, b_lin):
    """Fused single RNN step + Linear head.

    x : (N, I)  input at the (only) time step     h0: (N, H) initial hidden state
    w_ih: (H, I), w_hh: (H, H), b_ih/b_hh: (H,)   (PyTorch nn.RNN parameter layout)
    w_lin: (O, H), b_lin: (O,)                    (PyTorch nn.Linear parameter layout)
    Returns: y (N, O), h_new (N, H)
    """
    n, i = x.shape
    hdim = w_hh.shape[0]
    odim = w_lin.shape[0]

    n_pad = _round_up(max(n, 1), _SUBLANE)
    k = i + hdim + 1
    k_pad = _round_up(k, _LANE)
    h_pad = _round_up(hdim, _LANE)
    o_pad = _round_up(odim, _LANE)

    f32 = jnp.float32
    x = jnp.asarray(x, f32)
    h0 = jnp.asarray(h0, f32)

    # Fused MXU operand: [x | h_prev | 1], zero padded to (n_pad, k_pad).
    xh = jnp.concatenate([x, h0, jnp.ones((n, 1), f32)], axis=1)
    xh = jnp.pad(xh, ((0, n_pad - n), (0, k_pad - k)))

    # Stacked recurrent weights (bias folded in via the trailing ones column of xh).
    w_rec = jnp.concatenate(
        [
            jnp.asarray(w_ih, f32).T,                                    # (I, H)
            jnp.asarray(w_hh, f32).T,                                    # (H, H)
            (jnp.asarray(b_ih, f32) + jnp.asarray(b_hh, f32))[None, :],  # (1, H)
        ],
        axis=0,
    )
    w_rec = jnp.pad(w_rec, ((0, k_pad - k), (0, h_pad - hdim)))

    # Output head, zero padded to lane width.
    w_out = jnp.pad(jnp.asarray(w_lin, f32).T,
                    ((0, h_pad - hdim), (0, o_pad - odim)))
    b_out = jnp.pad(jnp.asarray(b_lin, f32), (0, o_pad - odim)).reshape(1, o_pad)

    vmem = pl.BlockSpec(memory_space=pltpu.MemorySpace.VMEM)
    out = pl.pallas_call(
        functools.partial(_numeric_fused_kernel, o_pad),
        out_shape=jax.ShapeDtypeStruct((n_pad, o_pad + h_pad), f32),
        in_specs=[vmem, vmem, vmem, vmem],
        out_specs=vmem,
    )(xh, w_rec, w_out, b_out)

    y = out[:n, :odim]
    h_new = out[:n, o_pad:o_pad + hdim]
    return y, h_new


def numeric_forward(X, state, params):
    """Faithful port of Numeric.forward.

    X: (B, T) numeric input. state: (num_directions*num_layers=1, T, H).
    Returns (output (T, output_size), new_state (1, T, H)).
    """
    X = X.astype(jnp.float32)
    B, T = X.shape
    # X.reshape(-1, *X.T.shape) -> (1, T, B) is a pure row-major reshape; with
    # seq_len == 1 the single RNN step sees a (T, B) input (rnn batch = T, input = B).
    x = X.reshape(T, B)
    h0 = state[0]                       # (T, H)

    y, h_new = rnn_numeric_pallas(
        x, h0,
        params["w_ih"], params["w_hh"], params["b_ih"], params["b_hh"],
        params["w_lin"], params["b_lin"],
    )
    output = y                          # (seq_len * rnn_batch, O) = (T, O)
    new_state = h_new[None]             # (1, T, H)
    return output, new_state


def _reference_forward(X, state, params):
    """Pure-JAX reference (mirrors torch nn.RNN tanh + nn.Linear for seq_len == 1)."""
    X = X.astype(jnp.float32)
    B, T = X.shape
    x = X.reshape(T, B)
    h = jnp.tanh(x @ params["w_ih"].T + params["b_ih"]
                 + state[0] @ params["w_hh"].T + params["b_hh"])
    out = h @ params["w_lin"].T + params["b_lin"]
    return out, h[None]


if __name__ == "__main__":
    # Module configuration implied by forward():
    #   X: (B, T) -> rnn.input_size = B, rnn batch = T, seq_len = 1
    B, T = 4, 8          # X shape
    H = 32               # rnn.hidden_size
    O = 8                # output_size
    INPUT_SIZE = B       # rnn.input_size must equal B for forward() to type-check

    key = jax.random.PRNGKey(0)
    kx, k1, k2, k3, k4, k5, k6 = jax.random.split(key, 7)

    # Deterministic parameter init (PyTorch-style uniform(-1/sqrt(H), 1/sqrt(H)))
    bound = 1.0 / jnp.sqrt(jnp.float32(H))
    params = {
        "w_ih": jax.random.uniform(k1, (H, INPUT_SIZE), jnp.float32, -bound, bound),
        "w_hh": jax.random.uniform(k2, (H, H), jnp.float32, -bound, bound),
        "b_ih": jax.random.uniform(k3, (H,), jnp.float32, -bound, bound),
        "b_hh": jax.random.uniform(k4, (H,), jnp.float32, -bound, bound),
        "w_lin": jax.random.uniform(k5, (O, H), jnp.float32, -bound, bound),
        "b_lin": jax.random.uniform(k6, (O,), jnp.float32, -bound, bound),
    }

    X = jax.random.normal(kx, (B, T), jnp.float32)
    # begin_state(): zeros of (num_directions * num_layers, rnn_batch, H) = (1, T, H)
    state = jnp.zeros((1, T, H), jnp.float32)

    out, new_state = numeric_forward(X, state, params)
    out = jax.block_until_ready(out)
    new_state = jax.block_until_ready(new_state)

    ref_out, ref_state = _reference_forward(X, state, params)
    assert out.shape == (T, O), out.shape
    assert new_state.shape == (1, T, H), new_state.shape
    assert jnp.allclose(out, ref_out, atol=1e-5, rtol=1e-5)
    assert jnp.allclose(new_state, ref_state, atol=1e-5, rtol=1e-5)

    print("KERNEL_OK")
</pallas_src>

<mosaic_0001>
module attributes {stable_mosaic.version = 11 : i64} {
  func.func @_numeric_fused_kernel(%arg0: memref<8x128xf32, #tpu.memory_space<vmem>>, %arg1: memref<128x128xf32, #tpu.memory_space<vmem>>, %arg2: memref<128x128xf32, #tpu.memory_space<vmem>>, %arg3: memref<1x128xf32, #tpu.memory_space<vmem>>, %arg4: memref<8x256xf32, #tpu.memory_space<vmem>>) attributes {dimension_semantics = [], scalar_prefetch = 0 : i64, scratch_operands = 0 : i64, tpu.core_type = #tpu.core_type<tc>} {
    %c0 = arith.constant 0 : index
    %c0_0 = arith.constant 0 : index
    %0 = vector.load %arg0[%c0, %c0_0] : memref<8x128xf32, #tpu.memory_space<vmem>>, vector<8x128xf32>
    %c0_1 = arith.constant 0 : index
    %c0_2 = arith.constant 0 : index
    %1 = vector.load %arg1[%c0_1, %c0_2] : memref<128x128xf32, #tpu.memory_space<vmem>>, vector<128x128xf32>
    %cst = arith.constant dense<0.000000e+00> : vector<8x128xf32>
    %2 = tpu.matmul %0, %1, %cst {dimension_numbers = #tpu.dot_dimension_numbers<[1], [0], [0], [1], [0, 0, 1, 1], [], []>} : vector<8x128xf32>, vector<128x128xf32>, vector<8x128xf32> -> vector<8x128xf32>
    %3 = math.tanh %2 : vector<8x128xf32>
    %c0_3 = arith.constant 0 : index
    %c0_4 = arith.constant 0 : index
    %4 = vector.load %arg2[%c0_3, %c0_4] : memref<128x128xf32, #tpu.memory_space<vmem>>, vector<128x128xf32>
    %cst_5 = arith.constant dense<0.000000e+00> : vector<8x128xf32>
    %5 = tpu.matmul %3, %4, %cst_5 {dimension_numbers = #tpu.dot_dimension_numbers<[1], [0], [0], [1], [0, 0, 1, 1], [], []>} : vector<8x128xf32>, vector<128x128xf32>, vector<8x128xf32> -> vector<8x128xf32>
    %c0_6 = arith.constant 0 : index
    %c0_7 = arith.constant 0 : index
    %6 = vector.load %arg3[%c0_6, %c0_7] : memref<1x128xf32, #tpu.memory_space<vmem>>, vector<1x128xf32>
    %7 = vector.broadcast %6 : vector<1x128xf32> to vector<8x128xf32>
    %8 = arith.addf %5, %7 : vector<8x128xf32>
    %c0_8 = arith.constant 0 : index
    %c0_9 = arith.constant 0 : index
    %9 = vector.load %arg4[%c0_8, %c0_9] : memref<8x256xf32, #tpu.memory_space<vmem>>, vector<8x128xf32>
    tpu.vector_store %arg4[%c0_8, %c0_9], %8 {strides = array<i32>} : memref<8x256xf32, #tpu.memory_space<vmem>>, vector<8x128xf32>,
    %c0_10 = arith.constant 0 : index
    %c128 = arith.constant 128 : index
    %10 = vector.load %arg4[%c0_10, %c128] : memref<8x256xf32, #tpu.memory_space<vmem>>, vector<8x128xf32>
    tpu.vector_store %arg4[%c0_10, %c128], %3 {strides = array<i32>} : memref<8x256xf32, #tpu.memory_space<vmem>>, vector<8x128xf32>,
    return
  }
}

</mosaic_0001>

<llo_original>
// kernel: tpu_custom_call.1
$region0: #{tpu_custom_call.1}
  #allocation0 [shape = 'u32[]', space=smem, size = 0x4, offset = 0x4, fixed_abs, tag = 'smem constant byte address 0x4 - core index']
  #allocation1 [shape = 'u32[144,128]{1,0:T(1,128)}', space=vmem, size = 0x12000, scoped, tag = 'internal scratch']
  %s0 = inlined_call_operand.hbm [shape: f32[8,128], index: 0, kind: input, shape index: {}]
  %s1 = inlined_call_operand.hbm [shape: f32[128,128], index: 1, kind: input, shape index: {}]
  %s2 = inlined_call_operand.hbm [shape: f32[128,128], index: 2, kind: input, shape index: {}]
  %s3 = inlined_call_operand.vmem [shape: f32[1,128], index: 3, kind: input, shape index: {}]
  %s4 = inlined_call_operand.hbm [shape: f32[8,256], index: 4, kind: output, shape index: {}]
  %s5 = sld [smem:[#allocation0]]
  $region38: #{tpu_custom_call.1} parent=0
    _
  %s7 = ssub.s32 1, %s5
  %s8 = scalar_select 0, %s7, %s5
  $region1: #{tpu_custom_call.1} parent=0
    #allocation2 [shape = 'u8[4096]{0}', space=vmem, size = 0x1000, scoped, tag = 'input window, operand 0, single buffered']
    #allocation3 [shape = 's32[1]{0}', space=sflag, size = 0x4, scoped, tag = 'scoped memory for tpu_custom_call.1']
    #allocation4 [shape = 's32[1]{0}', space=sflag, size = 0x4, scoped, tag = 'scoped memory for tpu_custom_call.1']
    #allocation5 [shape = 'u8[65536]{0}', space=vmem, size = 0x10000, scoped, tag = 'input window, operand 1, single buffered']
    #allocation6 [shape = 's32[1]{0}', space=sflag, size = 0x4, scoped, tag = 'scoped memory for tpu_custom_call.1']
    #allocation7 [shape = 'u8[65536]{0}', space=vmem, size = 0x10000, scoped, tag = 'input window, operand 2, single buffered']
    #allocation8 [shape = 'u8[8192]{0}', space=vmem, size = 0x2000, scoped, tag = 'output window, operand 0, single buffered']
    %9 = vsyncpa [#allocation3], 0
    %10 = vsyncpa [#allocation6], 0
    %11 = vsyncpa [#allocation4], 0
    // Predicated region
    $region2: #{tpu_custom_call.1} parent=1 // pred_check
      _
    $region3: #{tpu_custom_call.1} parent=1 // pred_check_branch
      %13 = sbr.rel (0) target = $region5
    $region4: #{tpu_custom_call.1} parent=1 // pred_region
      %s15 = ssub.s32 128, 128
      %16 = vsyncadd [#allocation3], %s15
      %s18 = sshll.u32 [#allocation2], 4
      %s19 = int_to_ptr.vmem [resolvable:$true] %s18
      %21 = dma.hbm_to_vmem [thread:$0]  %s0, 128, %s19, [#allocation3]
    $region5: #{tpu_custom_call.1} parent=1 // pred_fallthru
      _
    // Predicated region
    $region6: #{tpu_custom_call.1} parent=1 // pred_check
      _
    $region7: #{tpu_custom_call.1} parent=1 // pred_check_branch
      %23 = sbr.rel (0) target = $region9
    $region8: #{tpu_custom_call.1} parent=1 // pred_region
      %s25 = ssub.s32 2048, 2048
      %26 = vsyncadd [#allocation6], %s25
      %s27 = sshll.u32 [#allocation5], 4
      %s28 = int_to_ptr.vmem [resolvable:$true] %s27
      %33 = dma.hbm_to_vmem [thread:$0]  %s1, 2048, %s28, [#allocation6], 128, 128, 8
    $region9: #{tpu_custom_call.1} parent=1 // pred_fallthru
      _
    // Predicated region
    $region10: #{tpu_custom_call.1} parent=1 // pred_check
      _
    $region11: #{tpu_custom_call.1} parent=1 // pred_check_branch
      %35 = sbr.rel (0) target = $region13
    $region12: #{tpu_custom_call.1} parent=1 // pred_region
      %s37 = ssub.s32 2048, 2048
      %38 = vsyncadd [#allocation6], %s37
      %s39 = sshll.u32 [#allocation7], 4
      %s40 = int_to_ptr.vmem [resolvable:$true] %s39
      %45 = dma.hbm_to_vmem [thread:$0]  %s2, 2048, %s40, [#allocation6], 128, 128, 8
    $region13: #{tpu_custom_call.1} parent=1 // pred_fallthru
      _
    // Predicated region
    $region14: #{tpu_custom_call.1} parent=1 // pred_check
      _
    $region15: #{tpu_custom_call.1} parent=1 // pred_check_branch
      %47 = sbr.rel (0) target = $region17
    $region16: #{tpu_custom_call.1} parent=1 // pred_region
      _
    $region17: #{tpu_custom_call.1} parent=1 // pred_fallthru
      _
    // Predicated region
    $region18: #{tpu_custom_call.1} parent=1 // pred_check
      _
    $region19: #{tpu_custom_call.1} parent=1 // pred_check_branch
      %49 = sbr.rel (0) target = $region21
    $region20: #{tpu_custom_call.1} parent=1 // pred_region
      %50 = dma.done [#allocation3], 128
    $region21: #{tpu_custom_call.1} parent=1 // pred_fallthru
      _
    // Predicated region
    $region22: #{tpu_custom_call.1} parent=1 // pred_check
      _
    $region23: #{tpu_custom_call.1} parent=1 // pred_check_branch
      %52 = sbr.rel (0) target = $region25
    $region24: #{tpu_custom_call.1} parent=1 // pred_region
      %53 = dma.done [#allocation6], 2048
    $region25: #{tpu_custom_call.1} parent=1 // pred_fallthru
      _
    // Predicated region
    $region26: #{tpu_custom_call.1} parent=1 // pred_check
      _
    $region27: #{tpu_custom_call.1} parent=1 // pred_check_branch
      %55 = sbr.rel (0) target = $region29
    $region28: #{tpu_custom_call.1} parent=1 // pred_region
      %56 = dma.done [#allocation6], 2048
    $region29: #{tpu_custom_call.1} parent=1 // pred_fallthru
      _
    %v57 = vld [vmem:[#allocation2] sm:$0xff]
    %v58 = vld [vmem:[#allocation5] sm:$0xff]
    %v59 = vld [vmem:[#allocation5 + $0x8] sm:$0xff]
    %v60 = vld [vmem:[#allocation5 + $0x10] sm:$0xff]
    %v61 = vld [vmem:[#allocation5 + $0x18] sm:$0xff]
    %v62 = vld [vmem:[#allocation5 + $0x20] sm:$0xff]
    %v63 = vld [vmem:[#allocation5 + $0x28] sm:$0xff]
    %v64 = vld [vmem:[#allocation5 + $0x30] sm:$0xff]
    %v65 = vld [vmem:[#allocation5 + $0x38] sm:$0xff]
    %v66 = vld [vmem:[#allocation5 + $0x40] sm:$0xff]
    %v67 = vld [vmem:[#allocation5 + $0x48] sm:$0xff]
    %v68 = vld [vmem:[#allocation5 + $0x50] sm:$0xff]
    %v69 = vld [vmem:[#allocation5 + $0x58] sm:$0xff]
    %v70 = vld [vmem:[#allocation5 + $0x60] sm:$0xff]
    %v71 = vld [vmem:[#allocation5 + $0x68] sm:$0xff]
    %v72 = vld [vmem:[#allocation5 + $0x70] sm:$0xff]
    %v73 = vld [vmem:[#allocation5 + $0x78] sm:$0xff]
    %74 = vmatprep.subr.mxu0 0.0
    %75 = vmatpush1.msra.mxu0 %v73
    %76 = vmatprep.subr.mxu0 0.0
    %77 = vmatpush1.msra.mxu0 %v72
    %78 = vmatprep.subr.mxu0 0.0
    %79 = vmatpush1.msra.mxu0 %v71
    %80 = vmatprep.subr.mxu0 0.0
    %81 = vmatpush1.msra.mxu0 %v70
    %82 = vmatprep.subr.mxu0 0.0
    %83 = vmatpush1.msra.mxu0 %v69
    %84 = vmatprep.subr.mxu0 0.0
    %85 = vmatpush1.msra.mxu0 %v68
    %86 = vmatprep.subr.mxu0 0.0
    %87 = vmatpush1.msra.mxu0 %v67
    %88 = vmatprep.subr.mxu0 0.0
    %89 = vmatpush1.msra.mxu0 %v66
    %90 = vmatprep.subr.mxu0 0.0
    %91 = vmatpush1.msra.mxu0 %v65
    %92 = vmatprep.subr.mxu0 0.0
    %93 = vmatpush1.msra.mxu0 %v64
    %94 = vmatprep.subr.mxu0 0.0
    %95 = vmatpush1.msra.mxu0 %v63
    %96 = vmatprep.subr.mxu0 0.0
    %97 = vmatpush1.msra.mxu0 %v62
    %98 = vmatprep.subr.mxu0 0.0
    %99 = vmatpush1.msra.mxu0 %v61
    %100 = vmatprep.subr.mxu0 0.0
    %101 = vmatpush1.msra.mxu0 %v60
    %102 = vmatprep.subr.mxu0 0.0
    %103 = vmatpush1.msra.mxu0 %v59
    %104 = vmatprep.subr.mxu0 0.0
    %105 = vmatpush1.msra.mxu0 %v58
    %106 = vmatprep.subr.mxu0 0.0
    %107 = vmatpush2.msra.mxu0 0.0
    %108 = vmatprep.subr.mxu0 0.0
    %109 = vmatpush2.msra.mxu0 0.0
    %110 = vmatprep.subr.mxu0 0.0
    %111 = vmatpush2.msra.mxu0 0.0
    %112 = vmatprep.subr.mxu0 0.0
    %113 = vmatpush2.msra.mxu0 0.0
    %114 = vmatprep.subr.mxu0 0.0
    %115 = vmatpush2.msra.mxu0 0.0
    %116 = vmatprep.subr.mxu0 0.0
    %117 = vmatpush2.msra.mxu0 0.0
    %118 = vmatprep.subr.mxu0 0.0
    %119 = vmatpush2.msra.mxu0 0.0
    %120 = vmatprep.subr.mxu0 0.0
    %121 = vmatpush2.msra.mxu0 0.0
    %122 = vmatprep.subr.mxu0 0.0
    %123 = vmatpush2.msra.mxu0 0.0
    %124 = vmatprep.subr.mxu0 0.0
    %125 = vmatpush2.msra.mxu0 0.0
    %126 = vmatprep.subr.mxu0 0.0
    %127 = vmatpush2.msra.mxu0 0.0
    %128 = vmatprep.subr.mxu0 0.0
    %129 = vmatpush2.msra.mxu0 0.0
    %130 = vmatprep.subr.mxu0 0.0
    %131 = vmatpush2.msra.mxu0 0.0
    %132 = vmatprep.subr.mxu0 0.0
    %133 = vmatpush2.msra.mxu0 0.0
    %134 = vmatprep.subr.mxu0 0.0
    %135 = vmatpush2.msra.mxu0 0.0
    %136 = vmatprep.subr.mxu0 0.0
    %137 = vmatpush2.msra.mxu0 0.0
    %138 = vmatprep.mubr.f32.mxu0 0.0
    %139 = vmatmul.mubr.f32.gmra.mxu0 %v57
    %v140 = vpop.f32.mrf.mxu0
    %v141 = vadd.f32 0.0, %v140
    %v142 = vpop.f32.mrf.mxu0
    %143 = vdwg.mxu0
    %v144 = vtanh.pop %v141
    %v145 = vld [vmem:[#allocation7] sm:$0xff]
    %v146 = vld [vmem:[#allocation7 + $0x8] sm:$0xff]
    %v147 = vld [vmem:[#allocation7 + $0x10] sm:$0xff]
    %v148 = vld [vmem:[#allocation7 + $0x18] sm:$0xff]
    %v149 = vld [vmem:[#allocation7 + $0x20] sm:$0xff]
    %v150 = vld [vmem:[#allocation7 + $0x28] sm:$0xff]
    %v151 = vld [vmem:[#allocation7 + $0x30] sm:$0xff]
    %v152 = vld [vmem:[#allocation7 + $0x38] sm:$0xff]
    %v153 = vld [vmem:[#allocation7 + $0x40] sm:$0xff]
    %v154 = vld [vmem:[#allocation7 + $0x48] sm:$0xff]
    %v155 = vld [vmem:[#allocation7 + $0x50] sm:$0xff]
    %v156 = vld [vmem:[#allocation7 + $0x58] sm:$0xff]
    %v157 = vld [vmem:[#allocation7 + $0x60] sm:$0xff]
    %v158 = vld [vmem:[#allocation7 + $0x68] sm:$0xff]
    %v159 = vld [vmem:[#allocation7 + $0x70] sm:$0xff]
    %v160 = vld [vmem:[#allocation7 + $0x78] sm:$0xff]
    %v161 = vld [vmem:[%s3] sm:$0x1]
    %v163 = vlaneseq
    %v164 = vshrl.u32 %v163, 7
    %v165 = vsub.s32 0, %v164
    %v166 = vrot.slane %v161, %v165
    %168 = vmatprep.subr.mxu0 0.0
    %169 = vmatpush1.msra.mxu0 %v160
    %170 = vmatprep.subr.mxu0 0.0
    %171 = vmatpush1.msra.mxu0 %v159
    %172 = vmatprep.subr.mxu0 0.0
    %173 = vmatpush1.msra.mxu0 %v158
    %174 = vmatprep.subr.mxu0 0.0
    %175 = vmatpush1.msra.mxu0 %v157
    %176 = vmatprep.subr.mxu0 0.0
    %177 = vmatpush1.msra.mxu0 %v156
    %178 = vmatprep.subr.mxu0 0.0
    %179 = vmatpush1.msra.mxu0 %v155
    %180 = vmatprep.subr.mxu0 0.0
    %181 = vmatpush1.msra.mxu0 %v154
    %182 = vmatprep.subr.mxu0 0.0
    %183 = vmatpush1.msra.mxu0 %v153
    %184 = vmatprep.subr.mxu0 0.0
    %185 = vmatpush1.msra.mxu0 %v152
    %186 = vmatprep.subr.mxu0 0.0
    %187 = vmatpush1.msra.mxu0 %v151
    %188 = vmatprep.subr.mxu0 0.0
    %189 = vmatpush1.msra.mxu0 %v150
    %190 = vmatprep.subr.mxu0 0.0
    %191 = vmatpush1.msra.mxu0 %v149
    %192 = vmatprep.subr.mxu0 0.0
    %193 = vmatpush1.msra.mxu0 %v148
    %194 = vmatprep.subr.mxu0 0.0
    %195 = vmatpush1.msra.mxu0 %v147
    %196 = vmatprep.subr.mxu0 0.0
    %197 = vmatpush1.msra.mxu0 %v146
    %198 = vmatprep.subr.mxu0 0.0
    %199 = vmatpush1.msra.mxu0 %v145
    %200 = vmatprep.subr.mxu0 0.0
    %201 = vmatpush2.msra.mxu0 0.0
    %202 = vmatprep.subr.mxu0 0.0
    %203 = vmatpush2.msra.mxu0 0.0
    %204 = vmatprep.subr.mxu0 0.0
    %205 = vmatpush2.msra.mxu0 0.0
    %206 = vmatprep.subr.mxu0 0.0
    %207 = vmatpush2.msra.mxu0 0.0
    %208 = vmatprep.subr.mxu0 0.0
    %209 = vmatpush2.msra.mxu0 0.0
    %210 = vmatprep.subr.mxu0 0.0
    %211 = vmatpush2.msra.mxu0 0.0
    %212 = vmatprep.subr.mxu0 0.0
    %213 = vmatpush2.msra.mxu0 0.0
    %214 = vmatprep.subr.mxu0 0.0
    %215 = vmatpush2.msra.mxu0 0.0
    %216 = vmatprep.subr.mxu0 0.0
    %217 = vmatpush2.msra.mxu0 0.0
    %218 = vmatprep.subr.mxu0 0.0
    %219 = vmatpush2.msra.mxu0 0.0
    %220 = vmatprep.subr.mxu0 0.0
    %221 = vmatpush2.msra.mxu0 0.0
    %222 = vmatprep.subr.mxu0 0.0
    %223 = vmatpush2.msra.mxu0 0.0
    %224 = vmatprep.subr.mxu0 0.0
    %225 = vmatpush2.msra.mxu0 0.0
    %226 = vmatprep.subr.mxu0 0.0
    %227 = vmatpush2.msra.mxu0 0.0
    %228 = vmatprep.subr.mxu0 0.0
    %229 = vmatpush2.msra.mxu0 0.0
    %230 = vmatprep.subr.mxu0 0.0
    %231 = vmatpush2.msra.mxu0 0.0
    %232 = vmatprep.mubr.f32.mxu0 0.0
    %233 = vmatmul.mubr.f32.gmra.mxu0 %v144
    %v234 = vpop.f32.mrf.mxu0
    %v235 = vadd.f32 %v166, %v234
    %v236 = vpop.f32.mrf.mxu0
    %237 = vdwg.mxu0
    %238 = vst [vmem:[#allocation8] sm:$0xff] %v235
    %239 = vst [vmem:[#allocation8 + $0x8] sm:$0xff] %v144
    // Predicated region
    $region30: #{tpu_custom_call.1} parent=1 // pred_check
      _
    $region31: #{tpu_custom_call.1} parent=1 // pred_check_branch
      %241 = sbr.rel (0) target = $region33
    $region32: #{tpu_custom_call.1} parent=1 // pred_region
      %s243 = ssub.s32 256, 256
      %244 = vsyncadd [#allocation4], %s243
      %s246 = sshll.u32 [#allocation8], 4
      %s247 = int_to_ptr.vmem [resolvable:$true] %s246
      %249 = dma.vmem_to_hbm [thread:$0]  %s247, 256, %s4, [#allocation4]
    $region33: #{tpu_custom_call.1} parent=1 // pred_fallthru
      _
    // Predicated region
    $region34: #{tpu_custom_call.1} parent=1 // pred_check
      _
    $region35: #{tpu_custom_call.1} parent=1 // pred_check_branch
      %251 = sbr.rel (0) target = $region37
    $region36: #{tpu_custom_call.1} parent=1 // pred_region
      %252 = dma.done [#allocation4], 256
    $region37: #{tpu_custom_call.1} parent=1 // pred_fallthru
      _
    %253 = vsyncpa [#allocation3], 1
    %254 = vsyncpa [#allocation6], 1
    %255 = vsyncpa [#allocation4], 1

</llo_original>
